<compile_context>
chip_gen: v5e
topology: v5e:2x2
jax: 0.10.0
libtpu: 0.0.40
codegen_flags: <defaults>
</compile_context>

<pallas_src>
import jax
import jax.numpy as jnp
from jax.experimental import pallas as pl
from jax.experimental.pallas import tpu as pltpu

LEAKY_SLOPE = 0.01   # torch.nn.LeakyReLU default
BN_EPS = 1e-5        # torch.nn.BatchNorm1d default

H1, H1P = 500, 512   # fc1 out, padded
H2, H2P = 250, 256   # fc2 out, padded
OUTP = 128           # fc3 out padded to one lane-dense tile


def _leaky_relu(x):
    return jnp.where(x > 0, x, LEAKY_SLOPE * x)


def _round_up(n, m):
    return ((n + m - 1) // m) * m


# ----------------------------- kernel ---------------------------------------


def mlp_kernel(x_ref, w1_ref, b1_ref, w2_ref, b2_ref, w3_ref, b3_ref, o_ref):
    # fc1 (+ folded bn1) + LeakyReLU    (dropout1 == identity at inference)
    x = x_ref[...].astype(jnp.bfloat16)
    h = jnp.dot(x, w1_ref[...], preferred_element_type=jnp.float32) + b1_ref[...]
    h = _leaky_relu(h)

    # fc2 (+ folded bn2) + LeakyReLU    (dropout2 == identity at inference)
    h = jnp.dot(h.astype(jnp.bfloat16), w2_ref[...],
                preferred_element_type=jnp.float32) + b2_ref[...]
    h = _leaky_relu(h)

    # fc3 + sigmoid (exp on EUP, approximate reciprocal on EUP)
    h = jnp.dot(h.astype(jnp.bfloat16), w3_ref[...],
                preferred_element_type=jnp.float32) + b3_ref[...]
    e = jnp.exp(-h)
    o_ref[...] = pl.reciprocal(1.0 + e, approx=True).astype(o_ref.dtype)


# ----------------------------- wrapper ---------------------------------------


def binary_classifier_forward(x, prep, *, tb=512):
    """x: (B, input_size) float32. prep: folded/padded params (see prepare_params).

    Returns (B, 1) float32 sigmoid probabilities."""
    B, F = x.shape
    TB = min(tb, _round_up(B, 8))          # batch tile (multiple of 8 sublanes)
    padded_B = _round_up(B, TB)
    if padded_B != B:
        x = jnp.pad(x, ((0, padded_B - B), (0, 0)))

    grid = (padded_B // TB,)

    in_specs = [
        pl.BlockSpec((TB, F), lambda i: (i, 0)),                 # x: tiled on batch
        pl.BlockSpec(prep["w1"].shape, lambda i: (0, 0)),        # weights / biases:
        pl.BlockSpec(prep["b1"].shape, lambda i: (0, 0)),        # constant block ->
        pl.BlockSpec(prep["w2"].shape, lambda i: (0, 0)),        # VMEM-resident
        pl.BlockSpec(prep["b2"].shape, lambda i: (0, 0)),        # across the grid
        pl.BlockSpec(prep["w3"].shape, lambda i: (0, 0)),
        pl.BlockSpec(prep["b3"].shape, lambda i: (0, 0)),
    ]
    out_spec = pl.BlockSpec((TB, OUTP), lambda i: (i, 0))

    out = pl.pallas_call(
        mlp_kernel,
        out_shape=jax.ShapeDtypeStruct((padded_B, OUTP), jnp.float32),
        grid=grid,
        in_specs=in_specs,
        out_specs=out_spec,
        compiler_params=pltpu.CompilerParams(
            dimension_semantics=("parallel",)),   # v7x: shard batch over 2 TCs
    )(x, prep["w1"], prep["b1"], prep["w2"], prep["b2"], prep["w3"], prep["b3"])

    return out[:B, :1]


# -------------------- parameter construction / folding -----------------------


def init_raw_params(input_size, key):
    """Deterministic synthetic parameters matching BinaryClassifier.__init__ shapes
    (Linear weights stored transposed as (in, out); BN in eval mode)."""
    ks = jax.random.split(key, 8)

    def lin(kw, fan_in, fan_out):
        bound = 1.0 / jnp.sqrt(fan_in)
        w = jax.random.uniform(kw, (fan_in, fan_out), jnp.float32, -bound, bound)
        b = jnp.zeros((1, fan_out), jnp.float32)
        return w, b

    w1, b1 = lin(ks[0], input_size, H1)
    w2, b2 = lin(ks[1], H1, H2)
    w3, b3 = lin(ks[2], H2, 1)

    g1 = 1.0 + 0.1 * jax.random.normal(ks[3], (1, H1), jnp.float32)
    be1 = 0.1 * jax.random.normal(ks[4], (1, H1), jnp.float32)
    m1 = 0.05 * jax.random.normal(ks[5], (1, H1), jnp.float32)
    v1 = jnp.abs(1.0 + 0.1 * jax.random.normal(ks[6], (1, H1), jnp.float32))

    k2 = jax.random.split(ks[7], 4)
    g2 = 1.0 + 0.1 * jax.random.normal(k2[0], (1, H2), jnp.float32)
    be2 = 0.1 * jax.random.normal(k2[1], (1, H2), jnp.float32)
    m2 = 0.05 * jax.random.normal(k2[2], (1, H2), jnp.float32)
    v2 = jnp.abs(1.0 + 0.1 * jax.random.normal(k2[3], (1, H2), jnp.float32))

    return dict(w1=w1, b1=b1, g1=g1, be1=be1, m1=m1, v1=v1,
                w2=w2, b2=b2, g2=g2, be2=be2, m2=m2, v2=v2,
                w3=w3, b3=b3)


def prepare_params(p):
    """Fold eval-mode BatchNorm into fc1/fc2, zero-pad to 128-aligned dims,
    cast weights to bf16 (biases stay f32)."""
    s1 = p["g1"] * jax.lax.rsqrt(p["v1"] + BN_EPS)        # (1, H1)
    w1 = p["w1"] * s1                                     # (in, H1)
    b1 = (p["b1"] - p["m1"]) * s1 + p["be1"]              # (1, H1)

    s2 = p["g2"] * jax.lax.rsqrt(p["v2"] + BN_EPS)        # (1, H2)
    w2 = p["w2"] * s2                                     # (H1, H2)
    b2 = (p["b2"] - p["m2"]) * s2 + p["be2"]              # (1, H2)

    w3, b3 = p["w3"], p["b3"]                             # (H2, 1), (1, 1)

    # Zero-pad: 500->512, 250->256, 1->128 output lanes. Padded hidden channels
    # produce LeakyReLU(0)=0 activations and hit zero weight rows downstream,
    # so the math is unchanged.
    w1 = jnp.pad(w1, ((0, 0), (0, H1P - H1)))
    b1 = jnp.pad(b1, ((0, 0), (0, H1P - H1)))
    w2 = jnp.pad(w2, ((0, H1P - H1), (0, H2P - H2)))
    b2 = jnp.pad(b2, ((0, 0), (0, H2P - H2)))
    w3 = jnp.pad(w3, ((0, H2P - H2), (0, OUTP - 1)))
    b3 = jnp.pad(b3, ((0, 0), (0, OUTP - 1)))

    return dict(
        w1=w1.astype(jnp.bfloat16), b1=b1.astype(jnp.float32),
        w2=w2.astype(jnp.bfloat16), b2=b2.astype(jnp.float32),
        w3=w3.astype(jnp.bfloat16), b3=b3.astype(jnp.float32),
    )


# ----------------------------- references ------------------------------------


def reference_forward_f32(x, p):
    """Pure-JAX f32 reference of the original (unfolded) inference forward."""
    h = x @ p["w1"] + p["b1"]
    h = (h - p["m1"]) / jnp.sqrt(p["v1"] + BN_EPS) * p["g1"] + p["be1"]
    h = _leaky_relu(h)
    h = h @ p["w2"] + p["b2"]
    h = (h - p["m2"]) / jnp.sqrt(p["v2"] + BN_EPS) * p["g2"] + p["be2"]
    h = _leaky_relu(h)
    h = h @ p["w3"] + p["b3"]
    return jax.nn.sigmoid(h)


def reference_forward_matched(x, prep):
    """Pure-JAX reference using the same folded/padded bf16 params as the kernel."""
    h = jnp.dot(x.astype(jnp.bfloat16), prep["w1"],
                preferred_element_type=jnp.float32) + prep["b1"]
    h = _leaky_relu(h)
    h = jnp.dot(h.astype(jnp.bfloat16), prep["w2"],
                preferred_element_type=jnp.float32) + prep["b2"]
    h = _leaky_relu(h)
    h = jnp.dot(h.astype(jnp.bfloat16), prep["w3"],
                preferred_element_type=jnp.float32) + prep["b3"]
    return jax.nn.sigmoid(h)[:, :1]


# ----------------------------- main -------------------------------------------


if __name__ == "__main__":
    key = jax.random.PRNGKey(0)
    k_x, k_p = jax.random.split(key)

    batch, input_size = 8, 32
    x = jax.random.normal(k_x, (batch, input_size), jnp.float32)

    raw = init_raw_params(input_size, k_p)
    prep = prepare_params(raw)

    out = binary_classifier_forward(x, prep)
    out = jax.block_until_ready(out)
    assert out.shape == (batch, 1)

    # Same-precision reference (folded BN, bf16 weights): tight tolerance.
    ref_m = reference_forward_matched(x, prep)
    assert jnp.allclose(out, ref_m, atol=2e-3, rtol=2e-3), (out, ref_m)

    # Original f32, unfolded reference: loose tolerance (bf16 weight rounding).
    ref_f = reference_forward_f32(x, raw)
    assert jnp.allclose(out, ref_f, atol=5e-2, rtol=5e-2), (out, ref_f)

    # TODO(synk): Dropout layers are identity here (inference mode); training-mode
    # dropout would use pltpu.prng_seed / pltpu.stateful_bernoulli.
    print("KERNEL_OK")
</pallas_src>

<mosaic_0001>
module attributes {stable_mosaic.version = 11 : i64} {
  func.func @mlp_kernel(%arg0: i32, %arg1: memref<8x32xf32, #tpu.memory_space<vmem>>, %arg2: memref<32x512xbf16, #tpu.memory_space<vmem>>, %arg3: memref<1x512xf32, #tpu.memory_space<vmem>>, %arg4: memref<512x256xbf16, #tpu.memory_space<vmem>>, %arg5: memref<1x256xf32, #tpu.memory_space<vmem>>, %arg6: memref<256x128xbf16, #tpu.memory_space<vmem>>, %arg7: memref<1x128xf32, #tpu.memory_space<vmem>>, %arg8: memref<8x128xf32, #tpu.memory_space<vmem>>) attributes {dimension_semantics = [#tpu.dimension_semantics<parallel>], iteration_bounds = array<i64: 1>, scalar_prefetch = 0 : i64, scratch_operands = 0 : i64, tpu.core_type = #tpu.core_type<tc>, window_params = [{transform_indices = @transform_0, window_bounds = array<i64: 8, 32>}, {pipeline_mode = #tpu.pipeline_mode<synchronous>, transform_indices = @transform_1, window_bounds = array<i64: 32, 512>}, {pipeline_mode = #tpu.pipeline_mode<synchronous>, transform_indices = @transform_2, window_bounds = array<i64: 1, 512>}, {pipeline_mode = #tpu.pipeline_mode<synchronous>, transform_indices = @transform_3, window_bounds = array<i64: 512, 256>}, {pipeline_mode = #tpu.pipeline_mode<synchronous>, transform_indices = @transform_4, window_bounds = array<i64: 1, 256>}, {pipeline_mode = #tpu.pipeline_mode<synchronous>, transform_indices = @transform_5, window_bounds = array<i64: 256, 128>}, {pipeline_mode = #tpu.pipeline_mode<synchronous>, transform_indices = @transform_6, window_bounds = array<i64: 1, 128>}, {transform_indices = @transform_7, window_bounds = array<i64: 8, 128>}]} {
    %c0 = arith.constant 0 : index
    %c0_0 = arith.constant 0 : index
    %0 = vector.load %arg1[%c0, %c0_0] : memref<8x32xf32, #tpu.memory_space<vmem>>, vector<8x32xf32>
    %1 = arith.truncf %0 : vector<8x32xf32> to vector<8x32xbf16>
    %c0_1 = arith.constant 0 : index
    %c0_2 = arith.constant 0 : index
    %2 = vector.load %arg2[%c0_1, %c0_2] : memref<32x512xbf16, #tpu.memory_space<vmem>>, vector<32x512xbf16>
    %cst = arith.constant dense<0.000000e+00> : vector<8x512xf32>
    %3 = tpu.matmul %1, %2, %cst {dimension_numbers = #tpu.dot_dimension_numbers<[1], [0], [0], [1], [0, 0, 1, 1], [], []>} : vector<8x32xbf16>, vector<32x512xbf16>, vector<8x512xf32> -> vector<8x512xf32>
    %c0_3 = arith.constant 0 : index
    %c0_4 = arith.constant 0 : index
    %4 = vector.load %arg3[%c0_3, %c0_4] : memref<1x512xf32, #tpu.memory_space<vmem>>, vector<1x512xf32>
    %5 = vector.broadcast %4 : vector<1x512xf32> to vector<8x512xf32>
    %6 = arith.addf %3, %5 : vector<8x512xf32>
    %cst_5 = arith.constant 0.000000e+00 : f32
    %7 = vector.broadcast %cst_5 : f32 to vector<8x512xf32>
    %8 = arith.cmpf ogt, %6, %7 : vector<8x512xf32>
    %cst_6 = arith.constant 0.00999999977 : f32
    %9 = vector.broadcast %cst_6 : f32 to vector<8x512xf32>
    %10 = arith.mulf %9, %6 : vector<8x512xf32>
    %11 = arith.select %8, %6, %10 : vector<8x512xi1>, vector<8x512xf32>
    %12 = arith.truncf %11 : vector<8x512xf32> to vector<8x512xbf16>
    %c0_7 = arith.constant 0 : index
    %c0_8 = arith.constant 0 : index
    %13 = vector.load %arg4[%c0_7, %c0_8] : memref<512x256xbf16, #tpu.memory_space<vmem>>, vector<512x256xbf16>
    %cst_9 = arith.constant dense<0.000000e+00> : vector<8x256xf32>
    %14 = tpu.matmul %12, %13, %cst_9 {dimension_numbers = #tpu.dot_dimension_numbers<[1], [0], [0], [1], [0, 0, 1, 1], [], []>} : vector<8x512xbf16>, vector<512x256xbf16>, vector<8x256xf32> -> vector<8x256xf32>
    %c0_10 = arith.constant 0 : index
    %c0_11 = arith.constant 0 : index
    %15 = vector.load %arg5[%c0_10, %c0_11] : memref<1x256xf32, #tpu.memory_space<vmem>>, vector<1x256xf32>
    %16 = vector.broadcast %15 : vector<1x256xf32> to vector<8x256xf32>
    %17 = arith.addf %14, %16 : vector<8x256xf32>
    %cst_12 = arith.constant 0.000000e+00 : f32
    %18 = vector.broadcast %cst_12 : f32 to vector<8x256xf32>
    %19 = arith.cmpf ogt, %17, %18 : vector<8x256xf32>
    %cst_13 = arith.constant 0.00999999977 : f32
    %20 = vector.broadcast %cst_13 : f32 to vector<8x256xf32>
    %21 = arith.mulf %20, %17 : vector<8x256xf32>
    %22 = arith.select %19, %17, %21 : vector<8x256xi1>, vector<8x256xf32>
    %23 = arith.truncf %22 : vector<8x256xf32> to vector<8x256xbf16>
    %c0_14 = arith.constant 0 : index
    %c0_15 = arith.constant 0 : index
    %24 = vector.load %arg6[%c0_14, %c0_15] : memref<256x128xbf16, #tpu.memory_space<vmem>>, vector<256x128xbf16>
    %cst_16 = arith.constant dense<0.000000e+00> : vector<8x128xf32>
    %25 = tpu.matmul %23, %24, %cst_16 {dimension_numbers = #tpu.dot_dimension_numbers<[1], [0], [0], [1], [0, 0, 1, 1], [], []>} : vector<8x256xbf16>, vector<256x128xbf16>, vector<8x128xf32> -> vector<8x128xf32>
    %c0_17 = arith.constant 0 : index
    %c0_18 = arith.constant 0 : index
    %26 = vector.load %arg7[%c0_17, %c0_18] : memref<1x128xf32, #tpu.memory_space<vmem>>, vector<1x128xf32>
    %27 = vector.broadcast %26 : vector<1x128xf32> to vector<8x128xf32>
    %28 = arith.addf %25, %27 : vector<8x128xf32>
    %cst_19 = arith.constant 0.000000e+00 : f32
    %29 = vector.broadcast %cst_19 : f32 to vector<8x128xf32>
    %30 = arith.subf %29, %28 : vector<8x128xf32>
    %31 = math.exp %30 : vector<8x128xf32>
    %cst_20 = arith.constant 1.000000e+00 : f32
    %32 = vector.broadcast %cst_20 : f32 to vector<8x128xf32>
    %33 = arith.addf %32, %31 : vector<8x128xf32>
    %34 = tpu.reciprocal %33 {approx = true} : vector<8x128xf32> -> vector<8x128xf32>
    %c0_21 = arith.constant 0 : index
    %c0_22 = arith.constant 0 : index
    %35 = vector.load %arg8[%c0_21, %c0_22] : memref<8x128xf32, #tpu.memory_space<vmem>>, vector<8x128xf32>
    tpu.vector_store %arg8[%c0_21, %c0_22], %34 {strides = array<i32>} : memref<8x128xf32, #tpu.memory_space<vmem>>, vector<8x128xf32>,
    return
  }
  func.func @transform_0(%arg0: i32) -> (i32, i32) {
    %c0_i32 = arith.constant 0 : i32
    %c0_i32_0 = arith.constant 0 : i32
    return %arg0, %c0_i32 : i32, i32
  }
  func.func @transform_1(%arg0: i32) -> (i32, i32) {
    %c0_i32 = arith.constant 0 : i32
    %c0_i32_0 = arith.constant 0 : i32
    %c0_i32_1 = arith.constant 0 : i32
    return %c0_i32, %c0_i32_0 : i32, i32
  }
  func.func @transform_2(%arg0: i32) -> (i32, i32) {
    %c0_i32 = arith.constant 0 : i32
    %c0_i32_0 = arith.constant 0 : i32
    %c0_i32_1 = arith.constant 0 : i32
    return %c0_i32, %c0_i32_0 : i32, i32
  }
  func.func @transform_3(%arg0: i32) -> (i32, i32) {
    %c0_i32 = arith.constant 0 : i32
    %c0_i32_0 = arith.constant 0 : i32
    %c0_i32_1 = arith.constant 0 : i32
    return %c0_i32, %c0_i32_0 : i32, i32
  }
  func.func @transform_4(%arg0: i32) -> (i32, i32) {
    %c0_i32 = arith.constant 0 : i32
    %c0_i32_0 = arith.constant 0 : i32
    %c0_i32_1 = arith.constant 0 : i32
    return %c0_i32, %c0_i32_0 : i32, i32
  }
  func.func @transform_5(%arg0: i32) -> (i32, i32) {
    %c0_i32 = arith.constant 0 : i32
    %c0_i32_0 = arith.constant 0 : i32
    %c0_i32_1 = arith.constant 0 : i32
    return %c0_i32, %c0_i32_0 : i32, i32
  }
  func.func @transform_6(%arg0: i32) -> (i32, i32) {
    %c0_i32 = arith.constant 0 : i32
    %c0_i32_0 = arith.constant 0 : i32
    %c0_i32_1 = arith.constant 0 : i32
    return %c0_i32, %c0_i32_0 : i32, i32
  }
  func.func @transform_7(%arg0: i32) -> (i32, i32) {
    %c0_i32 = arith.constant 0 : i32
    %c0_i32_0 = arith.constant 0 : i32
    return %arg0, %c0_i32 : i32, i32
  }
}

</mosaic_0001>

<llo_original>
// kernel: tpu_custom_call.1
$region0: #{tpu_custom_call.1}
  #allocation0 [shape = 'u32[]', space=smem, size = 0x4, offset = 0x4, fixed_abs, tag = 'smem constant byte address 0x4 - core index']
  #allocation1 [shape = 'u32[72,128]{1,0:T(1,128)}', space=vmem, size = 0x9000, scoped, tag = 'internal scratch']
  %s0 = inlined_call_operand.hbm [shape: f32[8,32], index: 0, kind: input, shape index: {}]
  %s1 = inlined_call_operand.hbm [shape: bf16[32,512], index: 1, kind: input, shape index: {}]
  %s2 = inlined_call_operand.hbm [shape: f32[1,512], index: 2, kind: input, shape index: {}]
  %s3 = inlined_call_operand.hbm [shape: bf16[512,256], index: 3, kind: input, shape index: {}]
  %s4 = inlined_call_operand.vmem [shape: f32[1,256], index: 4, kind: input, shape index: {}]
  %s5 = inlined_call_operand.hbm [shape: bf16[256,128], index: 5, kind: input, shape index: {}]
  %s6 = inlined_call_operand.vmem [shape: f32[1,128], index: 6, kind: input, shape index: {}]
  %s7 = inlined_call_operand.hbm [shape: f32[8,128], index: 7, kind: output, shape index: {}]
  %s8 = sld [smem:[#allocation0]]
  $region58: #{tpu_custom_call.1} parent=0
    _
  %s10 = ssub.s32 1, %s8
  %s11 = scalar_select 0, %s10, %s8
  $region1: #{tpu_custom_call.1} parent=0
    #allocation2 [shape = 'u8[4096]{0}', space=vmem, size = 0x1000, scoped, tag = 'input window, operand 0, single buffered']
    #allocation3 [shape = 's32[1]{0}', space=sflag, size = 0x4, scoped, tag = 'scoped memory for tpu_custom_call.1']
    #allocation4 [shape = 's32[1]{0}', space=sflag, size = 0x4, scoped, tag = 'scoped memory for tpu_custom_call.1']
    #allocation5 [shape = 'u8[32768]{0}', space=vmem, size = 0x8000, scoped, tag = 'input window, operand 1, single buffered']
    #allocation6 [shape = 's32[1]{0}', space=sflag, size = 0x4, scoped, tag = 'scoped memory for tpu_custom_call.1']
    #allocation7 [shape = 'u8[2048]{0}', space=vmem, size = 0x800, scoped, tag = 'input window, operand 2, single buffered']
    #allocation8 [shape = 'u8[262144]{0}', space=vmem, size = 0x40000, scoped, tag = 'input window, operand 3, single buffered']
    #allocation9 [shape = 's32[1]{0}', space=sflag, size = 0x4, scoped, tag = 'scoped memory for tpu_custom_call.1']
    #allocation10 [shape = 'u8[65536]{0}', space=vmem, size = 0x10000, scoped, tag = 'input window, operand 5, single buffered']
    #allocation11 [shape = 'u8[4096]{0}', space=vmem, size = 0x1000, scoped, tag = 'output window, operand 0, single buffered']
    %12 = vsyncpa [#allocation3], 0
    %13 = vsyncpa [#allocation6], 0
    %14 = vsyncpa [#allocation9], 0
    %15 = vsyncpa [#allocation4], 0
    // Predicated region
    $region2: #{tpu_custom_call.1} parent=1 // pred_check
      _
    $region3: #{tpu_custom_call.1} parent=1 // pred_check_branch
      %17 = sbr.rel (0) target = $region5
    $region4: #{tpu_custom_call.1} parent=1 // pred_region
      %19 = vsyncadd [#allocation3], 0
      %s21 = sshll.u32 %s0, 4
      %s22 = int_to_ptr.hbm [resolvable:$true] %s21
      %s23 = sshll.u32 [#allocation2], 4
      %s24 = int_to_ptr.vmem [resolvable:$true] %s23
      %26 = dma.hbm_to_vmem [thread:$0]  %s22, 128, %s24, [#allocation3]
    $region5: #{tpu_custom_call.1} parent=1 // pred_fallthru
      _
    // Predicated region
    $region6: #{tpu_custom_call.1} parent=1 // pred_check
      _
    $region7: #{tpu_custom_call.1} parent=1 // pred_check_branch
      %28 = sbr.rel (0) target = $region9
    $region8: #{tpu_custom_call.1} parent=1 // pred_region
      %30 = vsyncadd [#allocation6], 0
      %s31 = sshll.u32 %s1, 4
      %s32 = int_to_ptr.hbm [resolvable:$true] %s31
      %s33 = sshll.u32 [#allocation5], 4
      %s34 = int_to_ptr.vmem [resolvable:$true] %s33
      %39 = dma.hbm_to_vmem [thread:$0]  %s32, 1024, %s34, [#allocation6], 256, 256, 16
    $region9: #{tpu_custom_call.1} parent=1 // pred_fallthru
      _
    // Predicated region
    $region10: #{tpu_custom_call.1} parent=1 // pred_check
      _
    $region11: #{tpu_custom_call.1} parent=1 // pred_check_branch
      %41 = sbr.rel (0) target = $region13
    $region12: #{tpu_custom_call.1} parent=1 // pred_region
      %43 = vsyncadd [#allocation6], 0
      %s45 = sshll.u32 %s2, 4
      %s46 = int_to_ptr.hbm [resolvable:$true] %s45
      %s47 = sshll.u32 [#allocation7], 4
      %s48 = int_to_ptr.vmem [resolvable:$true] %s47
      %50 = dma.hbm_to_vmem [thread:$0]  %s46, 64, %s48, [#allocation6]
    $region13: #{tpu_custom_call.1} parent=1 // pred_fallthru
      _
    // Predicated region
    $region14: #{tpu_custom_call.1} parent=1 // pred_check
      _
    $region15: #{tpu_custom_call.1} parent=1 // pred_check_branch
      %52 = sbr.rel (0) target = $region17
    $region16: #{tpu_custom_call.1} parent=1 // pred_region
      %54 = vsyncadd [#allocation9], 0
      %s55 = sshll.u32 %s3, 4
      %s56 = int_to_ptr.hbm [resolvable:$true] %s55
      %s57 = sshll.u32 [#allocation8], 4
      %s58 = int_to_ptr.vmem [resolvable:$true] %s57
      %63 = dma.hbm_to_vmem [thread:$0]  %s56, 8192, %s58, [#allocation9], 128, 128, 8
    $region17: #{tpu_custom_call.1} parent=1 // pred_fallthru
      _
    // Predicated region
    $region18: #{tpu_custom_call.1} parent=1 // pred_check
      _
    $region19: #{tpu_custom_call.1} parent=1 // pred_check_branch
      %65 = sbr.rel (0) target = $region21
    $region20: #{tpu_custom_call.1} parent=1 // pred_region
      _
    $region21: #{tpu_custom_call.1} parent=1 // pred_fallthru
      _
    // Predicated region
    $region22: #{tpu_custom_call.1} parent=1 // pred_check
      _
    $region23: #{tpu_custom_call.1} parent=1 // pred_check_branch
      %67 = sbr.rel (0) target = $region25
    $region24: #{tpu_custom_call.1} parent=1 // pred_region
      %69 = vsyncadd [#allocation9], 0
      %s70 = sshll.u32 %s5, 4
      %s71 = int_to_ptr.hbm [resolvable:$true] %s70
      %s72 = sshll.u32 [#allocation10], 4
      %s73 = int_to_ptr.vmem [resolvable:$true] %s72
      %78 = dma.hbm_to_vmem [thread:$0]  %s71, 2048, %s73, [#allocation9], 64, 64, 4
    $region25: #{tpu_custom_call.1} parent=1 // pred_fallthru
      _
    // Predicated region
    $region26: #{tpu_custom_call.1} parent=1 // pred_check
      _
    $region27: #{tpu_custom_call.1} parent=1 // pred_check_branch
      %80 = sbr.rel (0) target = $region29
    $region28: #{tpu_custom_call.1} parent=1 // pred_region
      _
    $region29: #{tpu_custom_call.1} parent=1 // pred_fallthru
      _
    // Predicated region
    $region30: #{tpu_custom_call.1} parent=1 // pred_check
      _
    $region31: #{tpu_custom_call.1} parent=1 // pred_check_branch
      %82 = sbr.rel (0) target = $region33
    $region32: #{tpu_custom_call.1} parent=1 // pred_region
      %84 = dma.done [#allocation3], 128
    $region33: #{tpu_custom_call.1} parent=1 // pred_fallthru
      _
    // Predicated region
    $region34: #{tpu_custom_call.1} parent=1 // pred_check
      _
    $region35: #{tpu_custom_call.1} parent=1 // pred_check_branch
      %86 = sbr.rel (0) target = $region37
    $region36: #{tpu_custom_call.1} parent=1 // pred_region
      %88 = dma.done [#allocation6], 1024
    $region37: #{tpu_custom_call.1} parent=1 // pred_fallthru
      _
    // Predicated region
    $region38: #{tpu_custom_call.1} parent=1 // pred_check
      _
    $region39: #{tpu_custom_call.1} parent=1 // pred_check_branch
      %90 = sbr.rel (0) target = $region41
    $region40: #{tpu_custom_call.1} parent=1 // pred_region
      %92 = dma.done [#allocation6], 64
    $region41: #{tpu_custom_call.1} parent=1 // pred_fallthru
      _
    // Predicated region
    $region42: #{tpu_custom_call.1} parent=1 // pred_check
      _
    $region43: #{tpu_custom_call.1} parent=1 // pred_check_branch
      %94 = sbr.rel (0) target = $region45
    $region44: #{tpu_custom_call.1} parent=1 // pred_region
      %96 = dma.done [#allocation9], 8192
    $region45: #{tpu_custom_call.1} parent=1 // pred_fallthru
      _
    // Predicated region
    $region46: #{tpu_custom_call.1} parent=1 // pred_check
      _
    $region47: #{tpu_custom_call.1} parent=1 // pred_check_branch
      %98 = sbr.rel (0) target = $region49
    $region48: #{tpu_custom_call.1} parent=1 // pred_region
      %100 = dma.done [#allocation9], 2048
    $region49: #{tpu_custom_call.1} parent=1 // pred_fallthru
      _
    %v102 = vld [vmem:[#allocation2] sm:$0xff]
    %v103 = vpack.c.bf16 %v102, %v102
    %v104 = vld [vmem:[#allocation5] sm:$0xff]
    %v105 = vld [vmem:[#allocation5 + $0x8] sm:$0xff]
    %v106 = vld [vmem:[#allocation5 + $0x10] sm:$0xff]
    %v107 = vld [vmem:[#allocation5 + $0x18] sm:$0xff]
    %v108 = vld [vmem:[#allocation5 + $0x20] sm:$0xff]
    %v109 = vld [vmem:[#allocation5 + $0x28] sm:$0xff]
    %v110 = vld [vmem:[#allocation5 + $0x30] sm:$0xff]
    %v111 = vld [vmem:[#allocation5 + $0x38] sm:$0xff]
    %v112 = vld [vmem:[#allocation7] sm:$0xf]
    %v114 = vperm.slane %v112, 0
    %v115 = vperm.slane %v112, 1
    %v116 = vperm.slane %v112, 2
    %v117 = vperm.slane %v112, 3
    %v130 = vunpack.c.l.b16 %v104
    %v131 = vunpack.c.h.b16 %v104
    %v132 = vunpack.c.l.b16 %v105
    %v133 = vunpack.c.h.b16 %v105
    %v134 = vunpack.c.l.b16 %v106
    %v135 = vunpack.c.h.b16 %v106
    %v136 = vunpack.c.l.b16 %v107
    %v137 = vunpack.c.h.b16 %v107
    %v138 = vunpack.c.l.b16 %v108
    %v139 = vunpack.c.h.b16 %v108
    %v140 = vunpack.c.l.b16 %v109
    %v141 = vunpack.c.h.b16 %v109
    %v142 = vunpack.c.l.b16 %v110
    %v143 = vunpack.c.h.b16 %v110
    %v144 = vunpack.c.l.b16 %v111
    %v145 = vunpack.c.h.b16 %v111
    %v146 = vpack.c.b16 %v134, %v130
    %v147 = vpack.c.b16 %v135, %v131
    %v148 = vpack.c.b16 %v136, %v132
    %v149 = vpack.c.b16 %v137, %v133
    %v150 = vpack.c.b16 %v142, %v138
    %v151 = vpack.c.b16 %v143, %v139
    %v152 = vpack.c.b16 %v144, %v140
    %v153 = vpack.c.b16 %v145, %v141
    %vm162 = vcmask 261120
    %v164 = vsel %vm162, %v103, 0
    %166 = vmatpush.bf16.msra.mxu0 0
    %167 = vmatpush.bf16.msra.mxu0 0
    %168 = vmatpush.bf16.msra.mxu0 0
    %169 = vmatpush.bf16.msra.mxu0 0
    %170 = vmatpush.bf16.msra.mxu0 0
    %171 = vmatpush.bf16.msra.mxu0 0
    %172 = vmatpush.bf16.msra.mxu0 %v150
    %173 = vmatpush.bf16.msra.mxu0 %v146
    %174 = vmatmul.bf16.gmra.mxu0 %v164
    %v175 = vpop.f32.mrf.mxu0
    %v176 = vadd.f32 %v114, %v175
    %v177 = vpop.f32.mrf.mxu0
    %178 = vdwg.mxu0
    %179 = vmatpush.bf16.msra.mxu0 0
    %180 = vmatpush.bf16.msra.mxu0 0
    %181 = vmatpush.bf16.msra.mxu0 0
    %182 = vmatpush.bf16.msra.mxu0 0
    %183 = vmatpush.bf16.msra.mxu0 0
    %184 = vmatpush.bf16.msra.mxu0 0
    %185 = vmatpush.bf16.msra.mxu0 %v151
    %186 = vmatpush.bf16.msra.mxu0 %v147
    %187 = vmatmul.bf16.gmra.mxu0 %v164
    %v188 = vpop.f32.mrf.mxu0
    %v189 = vadd.f32 %v115, %v188
    %v190 = vpop.f32.mrf.mxu0
    %191 = vdwg.mxu0
    %192 = vmatpush.bf16.msra.mxu0 0
    %193 = vmatpush.bf16.msra.mxu0 0
    %194 = vmatpush.bf16.msra.mxu0 0
    %195 = vmatpush.bf16.msra.mxu0 0
    %196 = vmatpush.bf16.msra.mxu0 0
    %197 = vmatpush.bf16.msra.mxu0 0
    %198 = vmatpush.bf16.msra.mxu0 %v152
    %199 = vmatpush.bf16.msra.mxu0 %v148
    %200 = vmatmul.bf16.gmra.mxu0 %v164
    %v201 = vpop.f32.mrf.mxu0
    %v202 = vadd.f32 %v116, %v201
    %v203 = vpop.f32.mrf.mxu0
    %204 = vdwg.mxu0
    %205 = vmatpush.bf16.msra.mxu0 0
    %206 = vmatpush.bf16.msra.mxu0 0
    %207 = vmatpush.bf16.msra.mxu0 0
    %208 = vmatpush.bf16.msra.mxu0 0
    %209 = vmatpush.bf16.msra.mxu0 0
    %210 = vmatpush.bf16.msra.mxu0 0
    %211 = vmatpush.bf16.msra.mxu0 %v153
    %212 = vmatpush.bf16.msra.mxu0 %v149
    %213 = vmatmul.bf16.gmra.mxu0 %v164
    %v214 = vpop.f32.mrf.mxu0
    %v215 = vadd.f32 %v117, %v214
    %v216 = vpop.f32.mrf.mxu0
    %217 = vdwg.mxu0
    %vm218 = vcmp.gt.f32.partialorder %v176, 0.0
    %vm219 = vcmp.gt.f32.partialorder %v189, 0.0
    %vm220 = vcmp.gt.f32.partialorder %v202, 0.0
    %vm221 = vcmp.gt.f32.partialorder %v215, 0.0
    %v222 = vmul.f32 %v176, 0.01
    %v223 = vmul.f32 %v189, 0.01
    %v224 = vmul.f32 %v202, 0.01
    %v225 = vmul.f32 %v215, 0.01
    %v226 = vsel %vm218, %v176, %v222
    %v227 = vsel %vm219, %v189, %v223
    %v228 = vsel %vm220, %v202, %v224
    %v229 = vsel %vm221, %v215, %v225
    %v230 = vpack.c.bf16 %v226, %v226
    %v231 = vpack.c.bf16 %v227, %v227
    %v232 = vpack.c.bf16 %v228, %v228
    %v233 = vpack.c.bf16 %v229, %v229
    %v234 = vld [vmem:[#allocation8] sm:$0xff]
    %v235 = vld [vmem:[#allocation8 + $0x8] sm:$0xff]
    %v236 = vld [vmem:[#allocation8 + $0x10] sm:$0xff]
    %v237 = vld [vmem:[#allocation8 + $0x18] sm:$0xff]
    %v238 = vld [vmem:[#allocation8 + $0x20] sm:$0xff]
    %v239 = vld [vmem:[#allocation8 + $0x28] sm:$0xff]
    %v240 = vld [vmem:[#allocation8 + $0x30] sm:$0xff]
    %v241 = vld [vmem:[#allocation8 + $0x38] sm:$0xff]
    %v242 = vld [vmem:[#allocation8 + $0x40] sm:$0xff]
    %v243 = vld [vmem:[#allocation8 + $0x48] sm:$0xff]
    %v244 = vld [vmem:[#allocation8 + $0x50] sm:$0xff]
    %v245 = vld [vmem:[#allocation8 + $0x58] sm:$0xff]
    %v246 = vld [vmem:[#allocation8 + $0x60] sm:$0xff]
    %v247 = vld [vmem:[#allocation8 + $0x68] sm:$0xff]
    %v248 = vld [vmem:[#allocation8 + $0x70] sm:$0xff]
    %v249 = vld [vmem:[#allocation8 + $0x78] sm:$0xff]
    %v250 = vld [vmem:[#allocation8 + $0x80] sm:$0xff]
    %v251 = vld [vmem:[#allocation8 + $0x88] sm:$0xff]
    %v252 = vld [vmem:[#allocation8 + $0x90] sm:$0xff]
    %v253 = vld [vmem:[#allocation8 + $0x98] sm:$0xff]
    %v254 = vld [vmem:[#allocation8 + $0xa0] sm:$0xff]
    %v255 = vld [vmem:[#allocation8 + $0xa8] sm:$0xff]
    %v256 = vld [vmem:[#allocation8 + $0xb0] sm:$0xff]
    %v257 = vld [vmem:[#allocation8 + $0xb8] sm:$0xff]
    %v258 = vld [vmem:[#allocation8 + $0xc0] sm:$0xff]
    %v259 = vld [vmem:[#allocation8 + $0xc8] sm:$0xff]
    %v260 = vld [vmem:[#allocation8 + $0xd0] sm:$0xff]
    %v261 = vld [vmem:[#allocation8 + $0xd8] sm:$0xff]
    %v262 = vld [vmem:[#allocation8 + $0xe0] sm:$0xff]
    %v263 = vld [vmem:[#allocation8 + $0xe8] sm:$0xff]
    %v264 = vld [vmem:[#allocation8 + $0xf0] sm:$0xff]
    %v265 = vld [vmem:[#allocation8 + $0xf8] sm:$0xff]
    %v266 = vld [vmem:[#allocation8 + $0x100] sm:$0xff]
    %v267 = vld [vmem:[#allocation8 + $0x108] sm:$0xff]
    %v268 = vld [vmem:[#allocation8 + $0x110] sm:$0xff]
    %v269 = vld [vmem:[#allocation8 + $0x118] sm:$0xff]
    %v270 = vld [vmem:[#allocation8 + $0x120] sm:$0xff]
    %v271 = vld [vmem:[#allocation8 + $0x128] sm:$0xff]
    %v272 = vld [vmem:[#allocation8 + $0x130] sm:$0xff]
    %v273 = vld [vmem:[#allocation8 + $0x138] sm:$0xff]
    %v274 = vld [vmem:[#allocation8 + $0x140] sm:$0xff]
    %v275 = vld [vmem:[#allocation8 + $0x148] sm:$0xff]
    %v276 = vld [vmem:[#allocation8 + $0x150] sm:$0xff]
    %v277 = vld [vmem:[#allocation8 + $0x158] sm:$0xff]
    %v278 = vld [vmem:[#allocation8 + $0x160] sm:$0xff]
    %v279 = vld [vmem:[#allocation8 + $0x168] sm:$0xff]
    %v280 = vld [vmem:[#allocation8 + $0x170] sm:$0xff]
    %v281 = vld [vmem:[#allocation8 + $0x178] sm:$0xff]
    %v282 = vld [vmem:[#allocation8 + $0x180] sm:$0xff]
    %v283 = vld [vmem:[#allocation8 + $0x188] sm:$0xff]
    %v284 = vld [vmem:[#allocation8 + $0x190] sm:$0xff]
    %v285 = vld [vmem:[#allocation8 + $0x198] sm:$0xff]
    %v286 = vld [vmem:[#allocation8 + $0x1a0] sm:$0xff]
    %v287 = vld [vmem:[#allocation8 + $0x1a8] sm:$0xff]
    %v288 = vld [vmem:[#allocation8 + $0x1b0] sm:$0xff]
    %v289 = vld [vmem:[#allocation8 + $0x1b8] sm:$0xff]
    %v290 = vld [vmem:[#allocation8 + $0x1c0] sm:$0xff]
    %v291 = vld [vmem:[#allocation8 + $0x1c8] sm:$0xff]
    %v292 = vld [vmem:[#allocation8 + $0x1d0] sm:$0xff]
    %v293 = vld [vmem:[#allocation8 + $0x1d8] sm:$0xff]
    %v294 = vld [vmem:[#allocation8 + $0x1e0] sm:$0xff]
    %v295 = vld [vmem:[#allocation8 + $0x1e8] sm:$0xff]
    %v296 = vld [vmem:[#allocation8 + $0x1f0] sm:$0xff]
    %v297 = vld [vmem:[#allocation8 + $0x1f8] sm:$0xff]
    %v298 = vld [vmem:[%s4] sm:$0x3]
    %v300 = vperm.slane %v298, 0
    %v301 = vperm.slane %v298, 1
    %v368 = vunpack.c.l.b16 %v234
    %v369 = vunpack.c.h.b16 %v234
    %v370 = vunpack.c.l.b16 %v235
    %v371 = vunpack.c.h.b16 %v235
    %v372 = vunpack.c.l.b16 %v236
    %v373 = vunpack.c.h.b16 %v236
    %v374 = vunpack.c.l.b16 %v237
    %v375 = vunpack.c.h.b16 %v237
    %v376 = vunpack.c.l.b16 %v238
    %v377 = vunpack.c.h.b16 %v238
    %v378 = vunpack.c.l.b16 %v239
    %v379 = vunpack.c.h.b16 %v239
    %v380 = vunpack.c.l.b16 %v240
    %v381 = vunpack.c.h.b16 %v240
    %v382 = vunpack.c.l.b16 %v241
    %v383 = vunpack.c.h.b16 %v241
    %v384 = vunpack.c.l.b16 %v242
    %v385 = vunpack.c.h.b16 %v242
    %v386 = vunpack.c.l.b16 %v243
    %v387 = vunpack.c.h.b16 %v243
    %v388 = vunpack.c.l.b16 %v244
    %v389 = vunpack.c.h.b16 %v244
    %v390 = vunpack.c.l.b16 %v245
    %v391 = vunpack.c.h.b16 %v245
    %v392 = vunpack.c.l.b16 %v246
    %v393 = vunpack.c.h.b16 %v246
    %v394 = vunpack.c.l.b16 %v247
    %v395 = vunpack.c.h.b16 %v247
    %v396 = vunpack.c.l.b16 %v248
    %v397 = vunpack.c.h.b16 %v248
    %v398 = vunpack.c.l.b16 %v249
    %v399 = vunpack.c.h.b16 %v249
    %v400 = vunpack.c.l.b16 %v250
    %v401 = vunpack.c.h.b16 %v250
    %v402 = vunpack.c.l.b16 %v251
    %v403 = vunpack.c.h.b16 %v251
    %v404 = vunpack.c.l.b16 %v252
    %v405 = vunpack.c.h.b16 %v252
    %v406 = vunpack.c.l.b16 %v253
    %v407 = vunpack.c.h.b16 %v253
    %v408 = vunpack.c.l.b16 %v254
    %v409 = vunpack.c.h.b16 %v254
    %v410 = vunpack.c.l.b16 %v255
    %v411 = vunpack.c.h.b16 %v255
    %v412 = vunpack.c.l.b16 %v256
    %v413 = vunpack.c.h.b16 %v256
    %v414 = vunpack.c.l.b16 %v257
    %v415 = vunpack.c.h.b16 %v257
    %v416 = vunpack.c.l.b16 %v258
    %v417 = vunpack.c.h.b16 %v258
    %v418 = vunpack.c.l.b16 %v259
    %v419 = vunpack.c.h.b16 %v259
    %v420 = vunpack.c.l.b16 %v260
    %v421 = vunpack.c.h.b16 %v260
    %v422 = vunpack.c.l.b16 %v261
    %v423 = vunpack.c.h.b16 %v261
    %v424 = vunpack.c.l.b16 %v262
    %v425 = vunpack.c.h.b16 %v262
    %v426 = vunpack.c.l.b16 %v263
    %v427 = vunpack.c.h.b16 %v263
    %v428 = vunpack.c.l.b16 %v264
    %v429 = vunpack.c.h.b16 %v264
    %v430 = vunpack.c.l.b16 %v265
    %v431 = vunpack.c.h.b16 %v265
    %v432 = vunpack.c.l.b16 %v266
    %v433 = vunpack.c.h.b16 %v266
    %v434 = vunpack.c.l.b16 %v267
    %v435 = vunpack.c.h.b16 %v267
    %v436 = vunpack.c.l.b16 %v268
    %v437 = vunpack.c.h.b16 %v268
    %v438 = vunpack.c.l.b16 %v269
    %v439 = vunpack.c.h.b16 %v269
    %v440 = vunpack.c.l.b16 %v270
    %v441 = vunpack.c.h.b16 %v270
    %v442 = vunpack.c.l.b16 %v271
    %v443 = vunpack.c.h.b16 %v271
    %v444 = vunpack.c.l.b16 %v272
    %v445 = vunpack.c.h.b16 %v272
    %v446 = vunpack.c.l.b16 %v273
    %v447 = vunpack.c.h.b16 %v273
    %v448 = vunpack.c.l.b16 %v274
    %v449 = vunpack.c.h.b16 %v274
    %v450 = vunpack.c.l.b16 %v275
    %v451 = vunpack.c.h.b16 %v275
    %v452 = vunpack.c.l.b16 %v276
    %v453 = vunpack.c.h.b16 %v276
    %v454 = vunpack.c.l.b16 %v277
    %v455 = vunpack.c.h.b16 %v277
    %v456 = vunpack.c.l.b16 %v278
    %v457 = vunpack.c.h.b16 %v278
    %v458 = vunpack.c.l.b16 %v279
    %v459 = vunpack.c.h.b16 %v279
    %v460 = vunpack.c.l.b16 %v280
    %v461 = vunpack.c.h.b16 %v280
    %v462 = vunpack.c.l.b16 %v281
    %v463 = vunpack.c.h.b16 %v281
    %v464 = vunpack.c.l.b16 %v282
    %v465 = vunpack.c.h.b16 %v282
    %v466 = vunpack.c.l.b16 %v283
    %v467 = vunpack.c.h.b16 %v283
    %v468 = vunpack.c.l.b16 %v284
    %v469 = vunpack.c.h.b16 %v284
    %v470 = vunpack.c.l.b16 %v285
    %v471 = vunpack.c.h.b16 %v285
    %v472 = vunpack.c.l.b16 %v286
    %v473 = vunpack.c.h.b16 %v286
    %v474 = vunpack.c.l.b16 %v287
    %v475 = vunpack.c.h.b16 %v287
    %v476 = vunpack.c.l.b16 %v288
    %v477 = vunpack.c.h.b16 %v288
    %v478 = vunpack.c.l.b16 %v289
    %v479 = vunpack.c.h.b16 %v289
    %v480 = vunpack.c.l.b16 %v290
    %v481 = vunpack.c.h.b16 %v290
    %v482 = vunpack.c.l.b16 %v291
    %v483 = vunpack.c.h.b16 %v291
    %v484 = vunpack.c.l.b16 %v292
    %v485 = vunpack.c.h.b16 %v292
    %v486 = vunpack.c.l.b16 %v293
    %v487 = vunpack.c.h.b16 %v293
    %v488 = vunpack.c.l.b16 %v294
    %v489 = vunpack.c.h.b16 %v294
    %v490 = vunpack.c.l.b16 %v295
    %v491 = vunpack.c.h.b16 %v295
    %v492 = vunpack.c.l.b16 %v296
    %v493 = vunpack.c.h.b16 %v296
    %v494 = vunpack.c.l.b16 %v297
    %v495 = vunpack.c.h.b16 %v297
    %v496 = vpack.c.b16 %v370, %v368
    %v497 = vpack.c.b16 %v371, %v369
    %v498 = vpack.c.b16 %v374, %v372
    %v499 = vpack.c.b16 %v375, %v373
    %v500 = vpack.c.b16 %v378, %v376
    %v501 = vpack.c.b16 %v379, %v377
    %v502 = vpack.c.b16 %v382, %v380
    %v503 = vpack.c.b16 %v383, %v381
    %v504 = vpack.c.b16 %v386, %v384
    %v505 = vpack.c.b16 %v387, %v385
    %v506 = vpack.c.b16 %v390, %v388
    %v507 = vpack.c.b16 %v391, %v389
    %v508 = vpack.c.b16 %v394, %v392
    %v509 = vpack.c.b16 %v395, %v393
    %v510 = vpack.c.b16 %v398, %v396
    %v511 = vpack.c.b16 %v399, %v397
    %v512 = vpack.c.b16 %v402, %v400
    %v513 = vpack.c.b16 %v403, %v401
    %v514 = vpack.c.b16 %v406, %v404
    %v515 = vpack.c.b16 %v407, %v405
    %v516 = vpack.c.b16 %v410, %v408
    %v517 = vpack.c.b16 %v411, %v409
    %v518 = vpack.c.b16 %v414, %v412
    %v519 = vpack.c.b16 %v415, %v413
    %v520 = vpack.c.b16 %v418, %v416
    %v521 = vpack.c.b16 %v419, %v417
    %v522 = vpack.c.b16 %v422, %v420
    %v523 = vpack.c.b16 %v423, %v421
    %v524 = vpack.c.b16 %v426, %v424
    %v525 = vpack.c.b16 %v427, %v425
    %v526 = vpack.c.b16 %v430, %v428
    %v527 = vpack.c.b16 %v431, %v429
    %v528 = vpack.c.b16 %v434, %v432
    %v529 = vpack.c.b16 %v435, %v433
    %v530 = vpack.c.b16 %v438, %v436
    %v531 = vpack.c.b16 %v439, %v437
    %v532 = vpack.c.b16 %v442, %v440
    %v533 = vpack.c.b16 %v443, %v441
    %v534 = vpack.c.b16 %v446, %v444
    %v535 = vpack.c.b16 %v447, %v445
    %v536 = vpack.c.b16 %v450, %v448
    %v537 = vpack.c.b16 %v451, %v449
    %v538 = vpack.c.b16 %v454, %v452
    %v539 = vpack.c.b16 %v455, %v453
    %v540 = vpack.c.b16 %v458, %v456
    %v541 = vpack.c.b16 %v459, %v457
    %v542 = vpack.c.b16 %v462, %v460
    %v543 = vpack.c.b16 %v463, %v461
    %v544 = vpack.c.b16 %v466, %v464
    %v545 = vpack.c.b16 %v467, %v465
    %v546 = vpack.c.b16 %v470, %v468
    %v547 = vpack.c.b16 %v471, %v469
    %v548 = vpack.c.b16 %v474, %v472
    %v549 = vpack.c.b16 %v475, %v473
    %v550 = vpack.c.b16 %v478, %v476
    %v551 = vpack.c.b16 %v479, %v477
    %v552 = vpack.c.b16 %v482, %v480
    %v553 = vpack.c.b16 %v483, %v481
    %v554 = vpack.c.b16 %v486, %v484
    %v555 = vpack.c.b16 %v487, %v485
    %v556 = vpack.c.b16 %v490, %v488
    %v557 = vpack.c.b16 %v491, %v489
    %v558 = vpack.c.b16 %v494, %v492
    %v559 = vpack.c.b16 %v495, %v493
    %624 = vmatpush.bf16.msra.mxu0 %v510
    %625 = vmatpush.bf16.msra.mxu0 %v508
    %626 = vmatpush.bf16.msra.mxu0 %v506
    %627 = vmatpush.bf16.msra.mxu0 %v504
    %628 = vmatpush.bf16.msra.mxu0 %v502
    %629 = vmatpush.bf16.msra.mxu0 %v500
    %630 = vmatpush.bf16.msra.mxu0 %v498
    %631 = vmatpush.bf16.msra.mxu0 %v496
    %632 = vmatmul.bf16.gmra.mxu0 %v230
    %v633 = vpop.f32.mrf.mxu0
    %v634 = vadd.f32 %v300, %v633
    %v635 = vpop.f32.mrf.mxu0
    %636 = vdwg.mxu0
    %637 = vmatpush.bf16.msra.mxu0 %v526
    %638 = vmatpush.bf16.msra.mxu0 %v524
    %639 = vmatpush.bf16.msra.mxu0 %v522
    %640 = vmatpush.bf16.msra.mxu0 %v520
    %641 = vmatpush.bf16.msra.mxu0 %v518
    %642 = vmatpush.bf16.msra.mxu0 %v516
    %643 = vmatpush.bf16.msra.mxu0 %v514
    %644 = vmatpush.bf16.msra.mxu0 %v512
    %645 = vmatmul.bf16.gmra.mxu0 %v231
    %v646 = vpop.f32.mrf.mxu0
    %v647 = vadd.f32 %v634, %v646
    %v648 = vpop.f32.mrf.mxu0
    %649 = vdwg.mxu0
    %650 = vmatpush.bf16.msra.mxu0 %v542
    %651 = vmatpush.bf16.msra.mxu0 %v540
    %652 = vmatpush.bf16.msra.mxu0 %v538
    %653 = vmatpush.bf16.msra.mxu0 %v536
    %654 = vmatpush.bf16.msra.mxu0 %v534
    %655 = vmatpush.bf16.msra.mxu0 %v532
    %656 = vmatpush.bf16.msra.mxu0 %v530
    %657 = vmatpush.bf16.msra.mxu0 %v528
    %658 = vmatmul.bf16.gmra.mxu0 %v232
    %v659 = vpop.f32.mrf.mxu0
    %v660 = vadd.f32 %v647, %v659
    %v661 = vpop.f32.mrf.mxu0
    %662 = vdwg.mxu0
    %663 = vmatpush.bf16.msra.mxu0 %v558
    %664 = vmatpush.bf16.msra.mxu0 %v556
    %665 = vmatpush.bf16.msra.mxu0 %v554
    %666 = vmatpush.bf16.msra.mxu0 %v552
    %667 = vmatpush.bf16.msra.mxu0 %v550
    %668 = vmatpush.bf16.msra.mxu0 %v548
    %669 = vmatpush.bf16.msra.mxu0 %v546
    %670 = vmatpush.bf16.msra.mxu0 %v544
    %671 = vmatmul.bf16.gmra.mxu0 %v233
    %v672 = vpop.f32.mrf.mxu0
    %v673 = vadd.f32 %v660, %v672
    %v674 = vpop.f32.mrf.mxu0
    %675 = vdwg.mxu0
    %676 = vmatpush.bf16.msra.mxu0 %v511
    %677 = vmatpush.bf16.msra.mxu0 %v509
    %678 = vmatpush.bf16.msra.mxu0 %v507
    %679 = vmatpush.bf16.msra.mxu0 %v505
    %680 = vmatpush.bf16.msra.mxu0 %v503
    %681 = vmatpush.bf16.msra.mxu0 %v501
    %682 = vmatpush.bf16.msra.mxu0 %v499
    %683 = vmatpush.bf16.msra.mxu0 %v497
    %684 = vmatmul.bf16.gmra.mxu0 %v230
    %v685 = vpop.f32.mrf.mxu0
    %v686 = vadd.f32 %v301, %v685
    %v687 = vpop.f32.mrf.mxu0
    %688 = vdwg.mxu0
    %689 = vmatpush.bf16.msra.mxu0 %v527
    %690 = vmatpush.bf16.msra.mxu0 %v525
    %691 = vmatpush.bf16.msra.mxu0 %v523
    %692 = vmatpush.bf16.msra.mxu0 %v521
    %693 = vmatpush.bf16.msra.mxu0 %v519
    %694 = vmatpush.bf16.msra.mxu0 %v517
    %695 = vmatpush.bf16.msra.mxu0 %v515
    %696 = vmatpush.bf16.msra.mxu0 %v513
    %697 = vmatmul.bf16.gmra.mxu0 %v231
    %v698 = vpop.f32.mrf.mxu0
    %v699 = vadd.f32 %v686, %v698
    %v700 = vpop.f32.mrf.mxu0
    %701 = vdwg.mxu0
    %702 = vmatpush.bf16.msra.mxu0 %v543
    %703 = vmatpush.bf16.msra.mxu0 %v541
    %704 = vmatpush.bf16.msra.mxu0 %v539
    %705 = vmatpush.bf16.msra.mxu0 %v537
    %706 = vmatpush.bf16.msra.mxu0 %v535
    %707 = vmatpush.bf16.msra.mxu0 %v533
    %708 = vmatpush.bf16.msra.mxu0 %v531
    %709 = vmatpush.bf16.msra.mxu0 %v529
    %710 = vmatmul.bf16.gmra.mxu0 %v232
    %v711 = vpop.f32.mrf.mxu0
    %v712 = vadd.f32 %v699, %v711
    %v713 = vpop.f32.mrf.mxu0
    %714 = vdwg.mxu0
    %715 = vmatpush.bf16.msra.mxu0 %v559
    %716 = vmatpush.bf16.msra.mxu0 %v557
    %717 = vmatpush.bf16.msra.mxu0 %v555
    %718 = vmatpush.bf16.msra.mxu0 %v553
    %719 = vmatpush.bf16.msra.mxu0 %v551
    %720 = vmatpush.bf16.msra.mxu0 %v549
    %721 = vmatpush.bf16.msra.mxu0 %v547
    %722 = vmatpush.bf16.msra.mxu0 %v545
    %723 = vmatmul.bf16.gmra.mxu0 %v233
    %v724 = vpop.f32.mrf.mxu0
    %v725 = vadd.f32 %v712, %v724
    %v726 = vpop.f32.mrf.mxu0
    %727 = vdwg.mxu0
    %vm728 = vcmp.gt.f32.partialorder %v673, 0.0
    %vm729 = vcmp.gt.f32.partialorder %v725, 0.0
    %v730 = vmul.f32 %v673, 0.01
    %v731 = vmul.f32 %v725, 0.01
    %v732 = vsel %vm728, %v673, %v730
    %v733 = vsel %vm729, %v725, %v731
    %v734 = vpack.c.bf16 %v732, %v732
    %v735 = vpack.c.bf16 %v733, %v733
    %v736 = vld [vmem:[#allocation10] sm:$0xf]
    %v737 = vld [vmem:[#allocation10 + $0x4] sm:$0xf]
    %v738 = vld [vmem:[#allocation10 + $0x8] sm:$0xf]
    %v739 = vld [vmem:[#allocation10 + $0xc] sm:$0xf]
    %v740 = vld [vmem:[#allocation10 + $0x10] sm:$0xf]
    %v741 = vld [vmem:[#allocation10 + $0x14] sm:$0xf]
    %v742 = vld [vmem:[#allocation10 + $0x18] sm:$0xf]
    %v743 = vld [vmem:[#allocation10 + $0x1c] sm:$0xf]
    %v744 = vld [vmem:[#allocation10 + $0x20] sm:$0xf]
    %v745 = vld [vmem:[#allocation10 + $0x24] sm:$0xf]
    %v746 = vld [vmem:[#allocation10 + $0x28] sm:$0xf]
    %v747 = vld [vmem:[#allocation10 + $0x2c] sm:$0xf]
    %v748 = vld [vmem:[#allocation10 + $0x30] sm:$0xf]
    %v749 = vld [vmem:[#allocation10 + $0x34] sm:$0xf]
    %v750 = vld [vmem:[#allocation10 + $0x38] sm:$0xf]
    %v751 = vld [vmem:[#allocation10 + $0x3c] sm:$0xf]
    %v752 = vld [vmem:[#allocation10 + $0x40] sm:$0xf]
    %v753 = vld [vmem:[#allocation10 + $0x44] sm:$0xf]
    %v754 = vld [vmem:[#allocation10 + $0x48] sm:$0xf]
    %v755 = vld [vmem:[#allocation10 + $0x4c] sm:$0xf]
    %v756 = vld [vmem:[#allocation10 + $0x50] sm:$0xf]
    %v757 = vld [vmem:[#allocation10 + $0x54] sm:$0xf]
    %v758 = vld [vmem:[#allocation10 + $0x58] sm:$0xf]
    %v759 = vld [vmem:[#allocation10 + $0x5c] sm:$0xf]
    %v760 = vld [vmem:[#allocation10 + $0x60] sm:$0xf]
    %v761 = vld [vmem:[#allocation10 + $0x64] sm:$0xf]
    %v762 = vld [vmem:[#allocation10 + $0x68] sm:$0xf]
    %v763 = vld [vmem:[#allocation10 + $0x6c] sm:$0xf]
    %v764 = vld [vmem:[#allocation10 + $0x70] sm:$0xf]
    %v765 = vld [vmem:[#allocation10 + $0x74] sm:$0xf]
    %v766 = vld [vmem:[#allocation10 + $0x78] sm:$0xf]
    %v767 = vld [vmem:[#allocation10 + $0x7c] sm:$0xf]
    %v768 = vld [vmem:[%s6] sm:$0x1]
    %v770 = vperm.slane %v768, 0
    %v804 = vunpack.c.l.b16 %v736
    %v805 = vunpack.c.l.b16 %v737
    %v806 = vunpack.c.l.b16 %v738
    %v807 = vunpack.c.l.b16 %v739
    %v808 = vunpack.c.l.b16 %v740
    %v809 = vunpack.c.l.b16 %v741
    %v810 = vunpack.c.l.b16 %v742
    %v811 = vunpack.c.l.b16 %v743
    %v812 = vunpack.c.l.b16 %v744
    %v813 = vunpack.c.l.b16 %v745
    %v814 = vunpack.c.l.b16 %v746
    %v815 = vunpack.c.l.b16 %v747
    %v816 = vunpack.c.l.b16 %v748
    %v817 = vunpack.c.l.b16 %v749
    %v818 = vunpack.c.l.b16 %v750
    %v819 = vunpack.c.l.b16 %v751
    %v820 = vunpack.c.l.b16 %v752
    %v821 = vunpack.c.l.b16 %v753
    %v822 = vunpack.c.l.b16 %v754
    %v823 = vunpack.c.l.b16 %v755
    %v824 = vunpack.c.l.b16 %v756
    %v825 = vunpack.c.l.b16 %v757
    %v826 = vunpack.c.l.b16 %v758
    %v827 = vunpack.c.l.b16 %v759
    %v828 = vunpack.c.l.b16 %v760
    %v829 = vunpack.c.l.b16 %v761
    %v830 = vunpack.c.l.b16 %v762
    %v831 = vunpack.c.l.b16 %v763
    %v832 = vunpack.c.l.b16 %v764
    %v833 = vunpack.c.l.b16 %v765
    %v834 = vunpack.c.l.b16 %v766
    %v835 = vunpack.c.l.b16 %v767
    %v836 = vpack.c.b16 %v805, %v804
    %v837 = vpack.c.b16 %v807, %v806
    %v838 = vpack.c.b16 %v809, %v808
    %v839 = vpack.c.b16 %v811, %v810
    %v840 = vpack.c.b16 %v813, %v812
    %v841 = vpack.c.b16 %v815, %v814
    %v842 = vpack.c.b16 %v817, %v816
    %v843 = vpack.c.b16 %v819, %v818
    %v844 = vpack.c.b16 %v821, %v820
    %v845 = vpack.c.b16 %v823, %v822
    %v846 = vpack.c.b16 %v825, %v824
    %v847 = vpack.c.b16 %v827, %v826
    %v848 = vpack.c.b16 %v829, %v828
    %v849 = vpack.c.b16 %v831, %v830
    %v850 = vpack.c.b16 %v833, %v832
    %v851 = vpack.c.b16 %v835, %v834
    %868 = vmatpush.bf16.msra.mxu0 %v843
    %869 = vmatpush.bf16.msra.mxu0 %v842
    %870 = vmatpush.bf16.msra.mxu0 %v841
    %871 = vmatpush.bf16.msra.mxu0 %v840
    %872 = vmatpush.bf16.msra.mxu0 %v839
    %873 = vmatpush.bf16.msra.mxu0 %v838
    %874 = vmatpush.bf16.msra.mxu0 %v837
    %875 = vmatpush.bf16.msra.mxu0 %v836
    %876 = vmatmul.bf16.gmra.mxu0 %v734
    %v877 = vpop.f32.mrf.mxu0
    %v878 = vadd.f32 %v770, %v877
    %v879 = vpop.f32.mrf.mxu0
    %880 = vdwg.mxu0
    %881 = vmatpush.bf16.msra.mxu0 %v851
    %882 = vmatpush.bf16.msra.mxu0 %v850
    %883 = vmatpush.bf16.msra.mxu0 %v849
    %884 = vmatpush.bf16.msra.mxu0 %v848
    %885 = vmatpush.bf16.msra.mxu0 %v847
    %886 = vmatpush.bf16.msra.mxu0 %v846
    %887 = vmatpush.bf16.msra.mxu0 %v845
    %888 = vmatpush.bf16.msra.mxu0 %v844
    %889 = vmatmul.bf16.gmra.mxu0 %v735
    %v890 = vpop.f32.mrf.mxu0
    %v891 = vadd.f32 %v878, %v890
    %v892 = vpop.f32.mrf.mxu0
    %893 = vdwg.mxu0
    %v894 = vsub.f32 0.0, %v891
    %v895 = vmul.f32 %v894, 1.442695
    %v896 = vpow.pop %v895
    %v897 = vadd.f32 %v896, 1.0
    %v898 = vrcp.pop %v897
    %899 = vst [vmem:[#allocation11] sm:$0xff] %v898
    // Predicated region
    $region50: #{tpu_custom_call.1} parent=1 // pred_check
      _
    $region51: #{tpu_custom_call.1} parent=1 // pred_check_branch
      %901 = sbr.rel (0) target = $region53
    $region52: #{tpu_custom_call.1} parent=1 // pred_region
      %903 = vsyncadd [#allocation4], 0
      %s905 = sshll.u32 [#allocation11], 4
      %s906 = int_to_ptr.vmem [resolvable:$true] %s905
      %s907 = sshll.u32 %s7, 4
      %s908 = int_to_ptr.hbm [resolvable:$true] %s907
      %910 = dma.vmem_to_hbm [thread:$0]  %s906, 128, %s908, [#allocation4]
    $region53: #{tpu_custom_call.1} parent=1 // pred_fallthru
      _
    // Predicated region
    $region54: #{tpu_custom_call.1} parent=1 // pred_check
      _
    $region55: #{tpu_custom_call.1} parent=1 // pred_check_branch
      %912 = sbr.rel (0) target = $region57
    $region56: #{tpu_custom_call.1} parent=1 // pred_region
      %914 = dma.done [#allocation4], 128
    $region57: #{tpu_custom_call.1} parent=1 // pred_fallthru
      _
    %915 = vsyncpa [#allocation3], 1
    %916 = vsyncpa [#allocation6], 1
    %917 = vsyncpa [#allocation9], 1
    %918 = vsyncpa [#allocation4], 1

</llo_original>
